<compile_context>
chip_gen: v6e
topology: v6e:2x2x1
jax: 0.10.0
libtpu: 0.0.40
codegen_flags: <defaults>
</compile_context>

<pallas_src>
import functools

import jax
import jax.numpy as jnp
from jax import lax
from jax.experimental import pallas as pl
from jax.experimental.pallas import tpu as pltpu

LANE = 128      # vreg lane width: pad feature/class dims to this
SUBLANE = 8     # f32 sublane height: batch tiles must be a multiple of this
MAX_TB = 512    # large batch tile -> ~85% of HBM roofline per the tiling sweep


def _round_up(n, m):
    return ((n + m - 1) // m) * m


def mlp_kernel(x_ref, w1_ref, b1_ref, w2_ref, b2_ref, w3_ref, b3_ref, o_ref,
               *, n_out):
    """One batch tile: fc1+sigmoid -> fc2+sigmoid -> fc3 -> log_softmax.

    x: (TB, NI_P) bf16; weights bf16 (in, out); biases f32 (1, out);
    output f32 (TB, NO_P) with only the first n_out class lanes meaningful.
    """
    h1 = jnp.dot(x_ref[...], w1_ref[...],
                 preferred_element_type=jnp.float32) + b1_ref[...]
    h1 = jax.nn.sigmoid(h1)

    h2 = jnp.dot(h1.astype(w2_ref.dtype), w2_ref[...],
                 preferred_element_type=jnp.float32) + b2_ref[...]
    h2 = jax.nn.sigmoid(h2)

    logits = jnp.dot(h2.astype(w3_ref.dtype), w3_ref[...],
                     preferred_element_type=jnp.float32) + b3_ref[...]

    # Padded class lanes must not leak into the softmax denominator.
    col = lax.broadcasted_iota(jnp.int32, logits.shape, 1)
    logits = jnp.where(col < n_out, logits, -1e30)

    # Numerically stable log_softmax along the class axis.
    m = jnp.max(logits, axis=-1, keepdims=True)
    shifted = logits - m
    lse = jnp.log(jnp.sum(jnp.exp(shifted), axis=-1, keepdims=True))
    o_ref[...] = (shifted - lse).astype(o_ref.dtype)


def mlp_forward(x, params):
    """x: (B, n_input) float32. params: dict of (w1,b1,w2,b2,w3,b3),
    weights stored pre-transposed as (in, out), biases as (1, out)."""
    w1, b1, w2, b2, w3, b3 = (params["w1"], params["b1"], params["w2"],
                              params["b2"], params["w3"], params["b3"])
    B, n_in = x.shape
    n_hidden = w1.shape[1]
    n_out = w3.shape[1]

    # Lane-dense padded sizes.
    ni_p = _round_up(n_in, LANE)
    nh_p = _round_up(n_hidden, LANE)
    no_p = _round_up(n_out, LANE)

    # Batch tile: big when B is big (pipelined grid), minimal when B is tiny.
    tb = MAX_TB if B > MAX_TB else max(SUBLANE, _round_up(B, SUBLANE))
    bp = _round_up(B, tb)

    def pad2(a, r, c):
        return jnp.pad(a, ((0, r - a.shape[0]), (0, c - a.shape[1])))

    # Zero-padding keeps the math exact: padded x columns hit zero w1 rows,
    # and sigmoid(0)=0.5 in padded hidden lanes multiplies zero w2/w3 rows.
    x_p = pad2(x, bp, ni_p).astype(jnp.bfloat16)
    w1_p = pad2(w1, ni_p, nh_p).astype(jnp.bfloat16)
    w2_p = pad2(w2, nh_p, nh_p).astype(jnp.bfloat16)
    w3_p = pad2(w3, nh_p, no_p).astype(jnp.bfloat16)
    b1_p = pad2(b1, 1, nh_p).astype(jnp.float32)
    b2_p = pad2(b2, 1, nh_p).astype(jnp.float32)
    b3_p = pad2(b3, 1, no_p).astype(jnp.float32)

    grid = (bp // tb,)
    kernel = functools.partial(mlp_kernel, n_out=n_out)

    flops = 2 * bp * (ni_p * nh_p + nh_p * nh_p + nh_p * no_p)
    bytes_accessed = (x_p.size * 2
                      + (w1_p.size + w2_p.size + w3_p.size) * 2
                      + (b1_p.size + b2_p.size + b3_p.size) * 4
                      + bp * no_p * 4)
    cost = pl.CostEstimate(flops=flops,
                           transcendentals=bp * (2 * nh_p + no_p),
                           bytes_accessed=bytes_accessed)

    out_p = pl.pallas_call(
        kernel,
        out_shape=jax.ShapeDtypeStruct((bp, no_p), jnp.float32),
        grid=grid,
        in_specs=[
            pl.BlockSpec((tb, ni_p), lambda i: (i, 0)),     # x tile (streamed)
            pl.BlockSpec((ni_p, nh_p), lambda i: (0, 0)),   # w1 (resident)
            pl.BlockSpec((1, nh_p), lambda i: (0, 0)),      # b1
            pl.BlockSpec((nh_p, nh_p), lambda i: (0, 0)),   # w2
            pl.BlockSpec((1, nh_p), lambda i: (0, 0)),      # b2
            pl.BlockSpec((nh_p, no_p), lambda i: (0, 0)),   # w3
            pl.BlockSpec((1, no_p), lambda i: (0, 0)),      # b3
        ],
        out_specs=pl.BlockSpec((tb, no_p), lambda i: (i, 0)),
        compiler_params=pltpu.CompilerParams(
            dimension_semantics=("parallel",)),
        cost_estimate=cost,
    )(x_p, w1_p, b1_p, w2_p, b2_p, w3_p, b3_p)

    return out_p[:B, :n_out]


def init_params(key, n_input, n_hidden, n_classes=10):
    """Deterministic init mimicking torch.nn.Linear default (U[-1/sqrt(fan_in), ...])."""
    ks = jax.random.split(key, 6)

    def linear(kw, kb, fan_in, fan_out):
        bound = 1.0 / jnp.sqrt(fan_in)
        w = jax.random.uniform(kw, (fan_in, fan_out), jnp.float32, -bound, bound)
        b = jax.random.uniform(kb, (1, fan_out), jnp.float32, -bound, bound)
        return w, b

    w1, b1 = linear(ks[0], ks[1], n_input, n_hidden)
    w2, b2 = linear(ks[2], ks[3], n_hidden, n_hidden)
    w3, b3 = linear(ks[4], ks[5], n_hidden, n_classes)
    return dict(w1=w1, b1=b1, w2=w2, b2=b2, w3=w3, b3=b3)


def mlp_reference(x, p):
    h1 = jax.nn.sigmoid(x @ p["w1"] + p["b1"])
    h2 = jax.nn.sigmoid(h1 @ p["w2"] + p["b2"])
    logits = h2 @ p["w3"] + p["b3"]
    return jax.nn.log_softmax(logits, axis=1)


if __name__ == "__main__":
    key = jax.random.PRNGKey(0)
    k_x, k_x2, k_p = jax.random.split(key, 3)

    n_input, n_hidden = 16, 32
    params = init_params(k_p, n_input, n_hidden)
    fwd = jax.jit(mlp_forward)

    # Small case (single grid step).
    B = 8
    x = jax.random.normal(k_x, (B, n_input), jnp.float32)
    out = jax.block_until_ready(fwd(x, params))
    ref = mlp_reference(x, params)
    assert out.shape == (B, 10)
    # bf16 operands with f32 accumulation: loose-but-meaningful tolerance.
    assert jnp.allclose(out, ref, atol=5e-2, rtol=5e-2), "mismatch vs reference (B=8)"

    # Larger case exercising the batch-tiled grid (2 steps) + row padding.
    B2 = 600
    x2 = jax.random.normal(k_x2, (B2, n_input), jnp.float32)
    out2 = jax.block_until_ready(fwd(x2, params))
    ref2 = mlp_reference(x2, params)
    assert out2.shape == (B2, 10)
    assert jnp.allclose(out2, ref2, atol=5e-2, rtol=5e-2), "mismatch vs reference (B=600)"

    print("KERNEL_OK")
</pallas_src>

<mosaic_0001>
module attributes {stable_mosaic.version = 11 : i64} {
  func.func @mlp_kernel(%arg0: i32, %arg1: memref<8x128xbf16, #tpu.memory_space<vmem>>, %arg2: memref<128x128xbf16, #tpu.memory_space<vmem>>, %arg3: memref<1x128xf32, #tpu.memory_space<vmem>>, %arg4: memref<128x128xbf16, #tpu.memory_space<vmem>>, %arg5: memref<1x128xf32, #tpu.memory_space<vmem>>, %arg6: memref<128x128xbf16, #tpu.memory_space<vmem>>, %arg7: memref<1x128xf32, #tpu.memory_space<vmem>>, %arg8: memref<8x128xf32, #tpu.memory_space<vmem>>) attributes {dimension_semantics = [#tpu.dimension_semantics<parallel>], iteration_bounds = array<i64: 1>, scalar_prefetch = 0 : i64, scratch_operands = 0 : i64, tpu.core_type = #tpu.core_type<tc>, window_params = [{transform_indices = @transform_0, window_bounds = array<i64: 8, 128>}, {pipeline_mode = #tpu.pipeline_mode<synchronous>, transform_indices = @transform_1, window_bounds = array<i64: 128, 128>}, {pipeline_mode = #tpu.pipeline_mode<synchronous>, transform_indices = @transform_2, window_bounds = array<i64: 1, 128>}, {pipeline_mode = #tpu.pipeline_mode<synchronous>, transform_indices = @transform_3, window_bounds = array<i64: 128, 128>}, {pipeline_mode = #tpu.pipeline_mode<synchronous>, transform_indices = @transform_4, window_bounds = array<i64: 1, 128>}, {pipeline_mode = #tpu.pipeline_mode<synchronous>, transform_indices = @transform_5, window_bounds = array<i64: 128, 128>}, {pipeline_mode = #tpu.pipeline_mode<synchronous>, transform_indices = @transform_6, window_bounds = array<i64: 1, 128>}, {transform_indices = @transform_7, window_bounds = array<i64: 8, 128>}]} {
    %c0 = arith.constant 0 : index
    %c0_0 = arith.constant 0 : index
    %0 = vector.load %arg1[%c0, %c0_0] : memref<8x128xbf16, #tpu.memory_space<vmem>>, vector<8x128xbf16>
    %c0_1 = arith.constant 0 : index
    %c0_2 = arith.constant 0 : index
    %1 = vector.load %arg2[%c0_1, %c0_2] : memref<128x128xbf16, #tpu.memory_space<vmem>>, vector<128x128xbf16>
    %cst = arith.constant dense<0.000000e+00> : vector<8x128xf32>
    %2 = tpu.matmul %0, %1, %cst {dimension_numbers = #tpu.dot_dimension_numbers<[1], [0], [0], [1], [0, 0, 1, 1], [], []>} : vector<8x128xbf16>, vector<128x128xbf16>, vector<8x128xf32> -> vector<8x128xf32>
    %c0_3 = arith.constant 0 : index
    %c0_4 = arith.constant 0 : index
    %3 = vector.load %arg3[%c0_3, %c0_4] : memref<1x128xf32, #tpu.memory_space<vmem>>, vector<1x128xf32>
    %4 = vector.broadcast %3 : vector<1x128xf32> to vector<8x128xf32>
    %5 = arith.addf %2, %4 : vector<8x128xf32>
    %6 = arith.negf %5 : vector<8x128xf32>
    %7 = math.exp %6 : vector<8x128xf32>
    %cst_5 = arith.constant 1.000000e+00 : f32
    %8 = vector.broadcast %cst_5 : f32 to vector<8x128xf32>
    %9 = arith.addf %8, %7 : vector<8x128xf32>
    %10 = arith.divf %8, %9 : vector<8x128xf32>
    %11 = arith.truncf %10 : vector<8x128xf32> to vector<8x128xbf16>
    %c0_6 = arith.constant 0 : index
    %c0_7 = arith.constant 0 : index
    %12 = vector.load %arg4[%c0_6, %c0_7] : memref<128x128xbf16, #tpu.memory_space<vmem>>, vector<128x128xbf16>
    %cst_8 = arith.constant dense<0.000000e+00> : vector<8x128xf32>
    %13 = tpu.matmul %11, %12, %cst_8 {dimension_numbers = #tpu.dot_dimension_numbers<[1], [0], [0], [1], [0, 0, 1, 1], [], []>} : vector<8x128xbf16>, vector<128x128xbf16>, vector<8x128xf32> -> vector<8x128xf32>
    %c0_9 = arith.constant 0 : index
    %c0_10 = arith.constant 0 : index
    %14 = vector.load %arg5[%c0_9, %c0_10] : memref<1x128xf32, #tpu.memory_space<vmem>>, vector<1x128xf32>
    %15 = vector.broadcast %14 : vector<1x128xf32> to vector<8x128xf32>
    %16 = arith.addf %13, %15 : vector<8x128xf32>
    %17 = arith.negf %16 : vector<8x128xf32>
    %18 = math.exp %17 : vector<8x128xf32>
    %cst_11 = arith.constant 1.000000e+00 : f32
    %19 = vector.broadcast %cst_11 : f32 to vector<8x128xf32>
    %20 = arith.addf %19, %18 : vector<8x128xf32>
    %21 = arith.divf %19, %20 : vector<8x128xf32>
    %22 = arith.truncf %21 : vector<8x128xf32> to vector<8x128xbf16>
    %c0_12 = arith.constant 0 : index
    %c0_13 = arith.constant 0 : index
    %23 = vector.load %arg6[%c0_12, %c0_13] : memref<128x128xbf16, #tpu.memory_space<vmem>>, vector<128x128xbf16>
    %cst_14 = arith.constant dense<0.000000e+00> : vector<8x128xf32>
    %24 = tpu.matmul %22, %23, %cst_14 {dimension_numbers = #tpu.dot_dimension_numbers<[1], [0], [0], [1], [0, 0, 1, 1], [], []>} : vector<8x128xbf16>, vector<128x128xbf16>, vector<8x128xf32> -> vector<8x128xf32>
    %c0_15 = arith.constant 0 : index
    %c0_16 = arith.constant 0 : index
    %25 = vector.load %arg7[%c0_15, %c0_16] : memref<1x128xf32, #tpu.memory_space<vmem>>, vector<1x128xf32>
    %26 = vector.broadcast %25 : vector<1x128xf32> to vector<8x128xf32>
    %27 = arith.addf %24, %26 : vector<8x128xf32>
    %28 = tpu.iota {dimensions = array<i32: 1>} : vector<8x128xi32>
    %c10_i32 = arith.constant 10 : i32
    %29 = vector.broadcast %c10_i32 : i32 to vector<8x128xi32>
    %30 = arith.cmpi slt, %28, %29 : vector<8x128xi32>
    %cst_17 = arith.constant -1.000000e+30 : f32
    %31 = vector.broadcast %cst_17 : f32 to vector<8x128xf32>
    %32 = arith.select %30, %27, %31 : vector<8x128xi1>, vector<8x128xf32>
    %cst_18 = arith.constant dense<0xFF800000> : vector<8xf32>
    %33 = vector.multi_reduction <maximumf>, %32, %cst_18 [1] : vector<8x128xf32> to vector<8xf32>
    %34 = vector.shape_cast %33 : vector<8xf32> to vector<8x1xf32>
    %35 = vector.broadcast %34 : vector<8x1xf32> to vector<8x128xf32>
    %36 = arith.subf %32, %35 : vector<8x128xf32>
    %37 = math.exp %36 : vector<8x128xf32>
    %cst_19 = arith.constant dense<0.000000e+00> : vector<8xf32>
    %38 = vector.multi_reduction <add>, %37, %cst_19 [1] : vector<8x128xf32> to vector<8xf32>
    %39 = vector.shape_cast %38 : vector<8xf32> to vector<8x1xf32>
    %40 = math.log %39 : vector<8x1xf32>
    %41 = vector.broadcast %40 : vector<8x1xf32> to vector<8x128xf32>
    %42 = arith.subf %36, %41 : vector<8x128xf32>
    %c0_20 = arith.constant 0 : index
    %c0_21 = arith.constant 0 : index
    %43 = vector.load %arg8[%c0_20, %c0_21] : memref<8x128xf32, #tpu.memory_space<vmem>>, vector<8x128xf32>
    tpu.vector_store %arg8[%c0_20, %c0_21], %42 {strides = array<i32>} : memref<8x128xf32, #tpu.memory_space<vmem>>, vector<8x128xf32>,
    return
  }
  func.func @transform_0(%arg0: i32) -> (i32, i32) {
    %c0_i32 = arith.constant 0 : i32
    %c0_i32_0 = arith.constant 0 : i32
    return %arg0, %c0_i32 : i32, i32
  }
  func.func @transform_1(%arg0: i32) -> (i32, i32) {
    %c0_i32 = arith.constant 0 : i32
    %c0_i32_0 = arith.constant 0 : i32
    %c0_i32_1 = arith.constant 0 : i32
    return %c0_i32, %c0_i32_0 : i32, i32
  }
  func.func @transform_2(%arg0: i32) -> (i32, i32) {
    %c0_i32 = arith.constant 0 : i32
    %c0_i32_0 = arith.constant 0 : i32
    %c0_i32_1 = arith.constant 0 : i32
    return %c0_i32, %c0_i32_0 : i32, i32
  }
  func.func @transform_3(%arg0: i32) -> (i32, i32) {
    %c0_i32 = arith.constant 0 : i32
    %c0_i32_0 = arith.constant 0 : i32
    %c0_i32_1 = arith.constant 0 : i32
    return %c0_i32, %c0_i32_0 : i32, i32
  }
  func.func @transform_4(%arg0: i32) -> (i32, i32) {
    %c0_i32 = arith.constant 0 : i32
    %c0_i32_0 = arith.constant 0 : i32
    %c0_i32_1 = arith.constant 0 : i32
    return %c0_i32, %c0_i32_0 : i32, i32
  }
  func.func @transform_5(%arg0: i32) -> (i32, i32) {
    %c0_i32 = arith.constant 0 : i32
    %c0_i32_0 = arith.constant 0 : i32
    %c0_i32_1 = arith.constant 0 : i32
    return %c0_i32, %c0_i32_0 : i32, i32
  }
  func.func @transform_6(%arg0: i32) -> (i32, i32) {
    %c0_i32 = arith.constant 0 : i32
    %c0_i32_0 = arith.constant 0 : i32
    %c0_i32_1 = arith.constant 0 : i32
    return %c0_i32, %c0_i32_0 : i32, i32
  }
  func.func @transform_7(%arg0: i32) -> (i32, i32) {
    %c0_i32 = arith.constant 0 : i32
    %c0_i32_0 = arith.constant 0 : i32
    return %arg0, %c0_i32 : i32, i32
  }
}

</mosaic_0001>

<llo_original>
// kernel: mlp_forward.1
$region0: #{mlp_forward.1}
  #allocation0 [shape = 'u32[]', space=smem, size = 0x4, offset = 0x4, fixed_abs, tag = 'smem constant byte address 0x4 - core index']
  #allocation1 [shape = 'u32[144,128]{1,0:T(1,128)}', space=vmem, size = 0x12000, scoped, tag = 'internal scratch']
  %s0 = inlined_call_operand.vmem [shape: bf16[8,128], index: 0, kind: input, shape index: {}]
  %s1 = inlined_call_operand.vmem [shape: bf16[128,128], index: 1, kind: input, shape index: {}]
  %s2 = inlined_call_operand.vmem [shape: f32[1,128], index: 2, kind: input, shape index: {}]
  %s3 = inlined_call_operand.vmem [shape: bf16[128,128], index: 3, kind: input, shape index: {}]
  %s4 = inlined_call_operand.vmem [shape: f32[1,128], index: 4, kind: input, shape index: {}]
  %s5 = inlined_call_operand.vmem [shape: bf16[128,128], index: 5, kind: input, shape index: {}]
  %s6 = inlined_call_operand.vmem [shape: f32[1,128], index: 6, kind: input, shape index: {}]
  %s7 = inlined_call_operand.hbm [shape: f32[8,128], index: 7, kind: output, shape index: {}]
  %s8 = sld [smem:[#allocation0]]
  $region38: #{mlp_forward.1} parent=0
    _
  %s10 = ssub.s32 1, %s8
  %s11 = scalar_select 0, %s10, %s8
  $region1: #{mlp_forward.1} parent=0
    #allocation2 [shape = 'u8[4096]{0}', space=vmem, size = 0x1000, scoped, tag = 'output window, operand 0, single buffered']
    #allocation3 [shape = 's32[1]{0}', space=sflag, size = 0x4, scoped, tag = 'scoped memory for mlp_forward.1']
    %12 = vsyncpa [#allocation3], 0
    // Predicated region
    $region2: #{mlp_forward.1} parent=1 // pred_check
      _
    $region3: #{mlp_forward.1} parent=1 // pred_check_branch
      %14 = sbr.rel (0) target = $region5
    $region4: #{mlp_forward.1} parent=1 // pred_region
      _
    $region5: #{mlp_forward.1} parent=1 // pred_fallthru
      _
    // Predicated region
    $region6: #{mlp_forward.1} parent=1 // pred_check
      _
    $region7: #{mlp_forward.1} parent=1 // pred_check_branch
      %16 = sbr.rel (0) target = $region9
    $region8: #{mlp_forward.1} parent=1 // pred_region
      _
    $region9: #{mlp_forward.1} parent=1 // pred_fallthru
      _
    // Predicated region
    $region10: #{mlp_forward.1} parent=1 // pred_check
      _
    $region11: #{mlp_forward.1} parent=1 // pred_check_branch
      %18 = sbr.rel (0) target = $region13
    $region12: #{mlp_forward.1} parent=1 // pred_region
      _
    $region13: #{mlp_forward.1} parent=1 // pred_fallthru
      _
    // Predicated region
    $region14: #{mlp_forward.1} parent=1 // pred_check
      _
    $region15: #{mlp_forward.1} parent=1 // pred_check_branch
      %20 = sbr.rel (0) target = $region17
    $region16: #{mlp_forward.1} parent=1 // pred_region
      _
    $region17: #{mlp_forward.1} parent=1 // pred_fallthru
      _
    // Predicated region
    $region18: #{mlp_forward.1} parent=1 // pred_check
      _
    $region19: #{mlp_forward.1} parent=1 // pred_check_branch
      %22 = sbr.rel (0) target = $region21
    $region20: #{mlp_forward.1} parent=1 // pred_region
      _
    $region21: #{mlp_forward.1} parent=1 // pred_fallthru
      _
    // Predicated region
    $region22: #{mlp_forward.1} parent=1 // pred_check
      _
    $region23: #{mlp_forward.1} parent=1 // pred_check_branch
      %24 = sbr.rel (0) target = $region25
    $region24: #{mlp_forward.1} parent=1 // pred_region
      _
    $region25: #{mlp_forward.1} parent=1 // pred_fallthru
      _
    // Predicated region
    $region26: #{mlp_forward.1} parent=1 // pred_check
      _
    $region27: #{mlp_forward.1} parent=1 // pred_check_branch
      %26 = sbr.rel (0) target = $region29
    $region28: #{mlp_forward.1} parent=1 // pred_region
      _
    $region29: #{mlp_forward.1} parent=1 // pred_fallthru
      _
    %v28 = vld [vmem:[%s0] sm:$0xf]
    %v29 = vld [vmem:[%s1] sm:$0xf]
    %v30 = vld [vmem:[%s1 + $0x4] sm:$0xf]
    %v31 = vld [vmem:[%s1 + $0x8] sm:$0xf]
    %v32 = vld [vmem:[%s1 + $0xc] sm:$0xf]
    %v33 = vld [vmem:[%s1 + $0x10] sm:$0xf]
    %v34 = vld [vmem:[%s1 + $0x14] sm:$0xf]
    %v35 = vld [vmem:[%s1 + $0x18] sm:$0xf]
    %v36 = vld [vmem:[%s1 + $0x1c] sm:$0xf]
    %v37 = vld [vmem:[%s1 + $0x20] sm:$0xf]
    %v38 = vld [vmem:[%s1 + $0x24] sm:$0xf]
    %v39 = vld [vmem:[%s1 + $0x28] sm:$0xf]
    %v40 = vld [vmem:[%s1 + $0x2c] sm:$0xf]
    %v41 = vld [vmem:[%s1 + $0x30] sm:$0xf]
    %v42 = vld [vmem:[%s1 + $0x34] sm:$0xf]
    %v43 = vld [vmem:[%s1 + $0x38] sm:$0xf]
    %v44 = vld [vmem:[%s1 + $0x3c] sm:$0xf]
    %v45 = vld [vmem:[%s2] sm:$0x1]
    %v47 = vlaneseq
    %v48 = vshrl.u32 %v47, 7
    %v49 = vsub.s32 0, %v48
    %v50 = vrot.slane %v45, %v49
    %v68 = vunpack.c.l.b16 %v29
    %v69 = vunpack.c.l.b16 %v30
    %v70 = vunpack.c.l.b16 %v31
    %v71 = vunpack.c.l.b16 %v32
    %v72 = vunpack.c.l.b16 %v33
    %v73 = vunpack.c.l.b16 %v34
    %v74 = vunpack.c.l.b16 %v35
    %v75 = vunpack.c.l.b16 %v36
    %v76 = vunpack.c.l.b16 %v37
    %v77 = vunpack.c.l.b16 %v38
    %v78 = vunpack.c.l.b16 %v39
    %v79 = vunpack.c.l.b16 %v40
    %v80 = vunpack.c.l.b16 %v41
    %v81 = vunpack.c.l.b16 %v42
    %v82 = vunpack.c.l.b16 %v43
    %v83 = vunpack.c.l.b16 %v44
    %v84 = vpack.c.b16 %v69, %v68
    %v85 = vpack.c.b16 %v71, %v70
    %v86 = vpack.c.b16 %v73, %v72
    %v87 = vpack.c.b16 %v75, %v74
    %v88 = vpack.c.b16 %v77, %v76
    %v89 = vpack.c.b16 %v79, %v78
    %v90 = vpack.c.b16 %v81, %v80
    %v91 = vpack.c.b16 %v83, %v82
    %100 = vmatprep.subr.bf16.mxu0 0
    %101 = vmatpush1.bf16.msra.mxu0 %v91
    %102 = vmatprep.subr.bf16.mxu0 0
    %103 = vmatpush1.bf16.msra.mxu0 %v90
    %104 = vmatprep.subr.bf16.mxu0 0
    %105 = vmatpush1.bf16.msra.mxu0 %v89
    %106 = vmatprep.subr.bf16.mxu0 0
    %107 = vmatpush1.bf16.msra.mxu0 %v88
    %108 = vmatprep.subr.bf16.mxu0 0
    %109 = vmatpush1.bf16.msra.mxu0 %v87
    %110 = vmatprep.subr.bf16.mxu0 0
    %111 = vmatpush1.bf16.msra.mxu0 %v86
    %112 = vmatprep.subr.bf16.mxu0 0
    %113 = vmatpush1.bf16.msra.mxu0 %v85
    %114 = vmatprep.subr.bf16.mxu0 0
    %115 = vmatpush1.bf16.msra.mxu0 %v84
    %116 = vmatprep.subr.bf16.mxu0 0
    %117 = vmatpush2.bf16.msra.mxu0 0
    %118 = vmatprep.subr.bf16.mxu0 0
    %119 = vmatpush2.bf16.msra.mxu0 0
    %120 = vmatprep.subr.bf16.mxu0 0
    %121 = vmatpush2.bf16.msra.mxu0 0
    %122 = vmatprep.subr.bf16.mxu0 0
    %123 = vmatpush2.bf16.msra.mxu0 0
    %124 = vmatprep.subr.bf16.mxu0 0
    %125 = vmatpush2.bf16.msra.mxu0 0
    %126 = vmatprep.subr.bf16.mxu0 0
    %127 = vmatpush2.bf16.msra.mxu0 0
    %128 = vmatprep.subr.bf16.mxu0 0
    %129 = vmatpush2.bf16.msra.mxu0 0
    %130 = vmatprep.subr.bf16.mxu0 0
    %131 = vmatpush2.bf16.msra.mxu0 0
    %132 = vmatprep.mubr.bf16.mxu0 0
    %133 = vmatmul.mubr.bf16.gmra.mxu0 %v28
    %v134 = vpop.f32.mrf.mxu0
    %v135 = vadd.f32 %v50, %v134
    %v136 = vpop.f32.mrf.mxu0
    %v137 = vpop.f32.mrf.mxu0
    %v138 = vpop.f32.mrf.mxu0
    %139 = vdwg.mxu0
    %v140 = vxor.u32 %v135, 2147483648
    %v141 = vmul.f32 %v140, 1.442695
    %v142 = vpow.pop %v141
    %v143 = vadd.f32 %v142, 1.0
    %v144 = vrcp.pop %v143
    %v145 = vmul.f32 1.0, %v144
    %v146 = vpack.c.bf16 %v145, %v145
    %v147 = vld [vmem:[%s3] sm:$0xf]
    %v148 = vld [vmem:[%s3 + $0x4] sm:$0xf]
    %v149 = vld [vmem:[%s3 + $0x8] sm:$0xf]
    %v150 = vld [vmem:[%s3 + $0xc] sm:$0xf]
    %v151 = vld [vmem:[%s3 + $0x10] sm:$0xf]
    %v152 = vld [vmem:[%s3 + $0x14] sm:$0xf]
    %v153 = vld [vmem:[%s3 + $0x18] sm:$0xf]
    %v154 = vld [vmem:[%s3 + $0x1c] sm:$0xf]
    %v155 = vld [vmem:[%s3 + $0x20] sm:$0xf]
    %v156 = vld [vmem:[%s3 + $0x24] sm:$0xf]
    %v157 = vld [vmem:[%s3 + $0x28] sm:$0xf]
    %v158 = vld [vmem:[%s3 + $0x2c] sm:$0xf]
    %v159 = vld [vmem:[%s3 + $0x30] sm:$0xf]
    %v160 = vld [vmem:[%s3 + $0x34] sm:$0xf]
    %v161 = vld [vmem:[%s3 + $0x38] sm:$0xf]
    %v162 = vld [vmem:[%s3 + $0x3c] sm:$0xf]
    %v163 = vld [vmem:[%s4] sm:$0x1]
    %v165 = vlaneseq
    %v166 = vshrl.u32 %v165, 7
    %v167 = vsub.s32 0, %v166
    %v168 = vrot.slane %v163, %v167
    %v186 = vunpack.c.l.b16 %v147
    %v187 = vunpack.c.l.b16 %v148
    %v188 = vunpack.c.l.b16 %v149
    %v189 = vunpack.c.l.b16 %v150
    %v190 = vunpack.c.l.b16 %v151
    %v191 = vunpack.c.l.b16 %v152
    %v192 = vunpack.c.l.b16 %v153
    %v193 = vunpack.c.l.b16 %v154
    %v194 = vunpack.c.l.b16 %v155
    %v195 = vunpack.c.l.b16 %v156
    %v196 = vunpack.c.l.b16 %v157
    %v197 = vunpack.c.l.b16 %v158
    %v198 = vunpack.c.l.b16 %v159
    %v199 = vunpack.c.l.b16 %v160
    %v200 = vunpack.c.l.b16 %v161
    %v201 = vunpack.c.l.b16 %v162
    %v202 = vpack.c.b16 %v187, %v186
    %v203 = vpack.c.b16 %v189, %v188
    %v204 = vpack.c.b16 %v191, %v190
    %v205 = vpack.c.b16 %v193, %v192
    %v206 = vpack.c.b16 %v195, %v194
    %v207 = vpack.c.b16 %v197, %v196
    %v208 = vpack.c.b16 %v199, %v198
    %v209 = vpack.c.b16 %v201, %v200
    %218 = vmatprep.subr.bf16.mxu0 0
    %219 = vmatpush1.bf16.msra.mxu0 %v209
    %220 = vmatprep.subr.bf16.mxu0 0
    %221 = vmatpush1.bf16.msra.mxu0 %v208
    %222 = vmatprep.subr.bf16.mxu0 0
    %223 = vmatpush1.bf16.msra.mxu0 %v207
    %224 = vmatprep.subr.bf16.mxu0 0
    %225 = vmatpush1.bf16.msra.mxu0 %v206
    %226 = vmatprep.subr.bf16.mxu0 0
    %227 = vmatpush1.bf16.msra.mxu0 %v205
    %228 = vmatprep.subr.bf16.mxu0 0
    %229 = vmatpush1.bf16.msra.mxu0 %v204
    %230 = vmatprep.subr.bf16.mxu0 0
    %231 = vmatpush1.bf16.msra.mxu0 %v203
    %232 = vmatprep.subr.bf16.mxu0 0
    %233 = vmatpush1.bf16.msra.mxu0 %v202
    %234 = vmatprep.subr.bf16.mxu0 0
    %235 = vmatpush2.bf16.msra.mxu0 0
    %236 = vmatprep.subr.bf16.mxu0 0
    %237 = vmatpush2.bf16.msra.mxu0 0
    %238 = vmatprep.subr.bf16.mxu0 0
    %239 = vmatpush2.bf16.msra.mxu0 0
    %240 = vmatprep.subr.bf16.mxu0 0
    %241 = vmatpush2.bf16.msra.mxu0 0
    %242 = vmatprep.subr.bf16.mxu0 0
    %243 = vmatpush2.bf16.msra.mxu0 0
    %244 = vmatprep.subr.bf16.mxu0 0
    %245 = vmatpush2.bf16.msra.mxu0 0
    %246 = vmatprep.subr.bf16.mxu0 0
    %247 = vmatpush2.bf16.msra.mxu0 0
    %248 = vmatprep.subr.bf16.mxu0 0
    %249 = vmatpush2.bf16.msra.mxu0 0
    %250 = vmatprep.mubr.bf16.mxu0 0
    %251 = vmatmul.mubr.bf16.gmra.mxu0 %v146
    %v252 = vpop.f32.mrf.mxu0
    %v253 = vadd.f32 %v168, %v252
    %v254 = vpop.f32.mrf.mxu0
    %v255 = vpop.f32.mrf.mxu0
    %v256 = vpop.f32.mrf.mxu0
    %257 = vdwg.mxu0
    %v258 = vxor.u32 %v253, 2147483648
    %v259 = vmul.f32 %v258, 1.442695
    %v260 = vpow.pop %v259
    %v261 = vadd.f32 %v260, 1.0
    %v262 = vrcp.pop %v261
    %v263 = vmul.f32 1.0, %v262
    %v264 = vpack.c.bf16 %v263, %v263
    %v265 = vld [vmem:[%s5] sm:$0xf]
    %v266 = vld [vmem:[%s5 + $0x4] sm:$0xf]
    %v267 = vld [vmem:[%s5 + $0x8] sm:$0xf]
    %v268 = vld [vmem:[%s5 + $0xc] sm:$0xf]
    %v269 = vld [vmem:[%s5 + $0x10] sm:$0xf]
    %v270 = vld [vmem:[%s5 + $0x14] sm:$0xf]
    %v271 = vld [vmem:[%s5 + $0x18] sm:$0xf]
    %v272 = vld [vmem:[%s5 + $0x1c] sm:$0xf]
    %v273 = vld [vmem:[%s5 + $0x20] sm:$0xf]
    %v274 = vld [vmem:[%s5 + $0x24] sm:$0xf]
    %v275 = vld [vmem:[%s5 + $0x28] sm:$0xf]
    %v276 = vld [vmem:[%s5 + $0x2c] sm:$0xf]
    %v277 = vld [vmem:[%s5 + $0x30] sm:$0xf]
    %v278 = vld [vmem:[%s5 + $0x34] sm:$0xf]
    %v279 = vld [vmem:[%s5 + $0x38] sm:$0xf]
    %v280 = vld [vmem:[%s5 + $0x3c] sm:$0xf]
    %v281 = vld [vmem:[%s6] sm:$0x1]
    %v283 = vlaneseq
    %v284 = vshrl.u32 %v283, 7
    %v285 = vsub.s32 0, %v284
    %v286 = vrot.slane %v281, %v285
    %v304 = vunpack.c.l.b16 %v265
    %v305 = vunpack.c.l.b16 %v266
    %v306 = vunpack.c.l.b16 %v267
    %v307 = vunpack.c.l.b16 %v268
    %v308 = vunpack.c.l.b16 %v269
    %v309 = vunpack.c.l.b16 %v270
    %v310 = vunpack.c.l.b16 %v271
    %v311 = vunpack.c.l.b16 %v272
    %v312 = vunpack.c.l.b16 %v273
    %v313 = vunpack.c.l.b16 %v274
    %v314 = vunpack.c.l.b16 %v275
    %v315 = vunpack.c.l.b16 %v276
    %v316 = vunpack.c.l.b16 %v277
    %v317 = vunpack.c.l.b16 %v278
    %v318 = vunpack.c.l.b16 %v279
    %v319 = vunpack.c.l.b16 %v280
    %v320 = vpack.c.b16 %v305, %v304
    %v321 = vpack.c.b16 %v307, %v306
    %v322 = vpack.c.b16 %v309, %v308
    %v323 = vpack.c.b16 %v311, %v310
    %v324 = vpack.c.b16 %v313, %v312
    %v325 = vpack.c.b16 %v315, %v314
    %v326 = vpack.c.b16 %v317, %v316
    %v327 = vpack.c.b16 %v319, %v318
    %336 = vmatprep.subr.bf16.mxu0 0
    %337 = vmatpush1.bf16.msra.mxu0 %v327
    %338 = vmatprep.subr.bf16.mxu0 0
    %339 = vmatpush1.bf16.msra.mxu0 %v326
    %340 = vmatprep.subr.bf16.mxu0 0
    %341 = vmatpush1.bf16.msra.mxu0 %v325
    %342 = vmatprep.subr.bf16.mxu0 0
    %343 = vmatpush1.bf16.msra.mxu0 %v324
    %344 = vmatprep.subr.bf16.mxu0 0
    %345 = vmatpush1.bf16.msra.mxu0 %v323
    %346 = vmatprep.subr.bf16.mxu0 0
    %347 = vmatpush1.bf16.msra.mxu0 %v322
    %348 = vmatprep.subr.bf16.mxu0 0
    %349 = vmatpush1.bf16.msra.mxu0 %v321
    %350 = vmatprep.subr.bf16.mxu0 0
    %351 = vmatpush1.bf16.msra.mxu0 %v320
    %352 = vmatprep.subr.bf16.mxu0 0
    %353 = vmatpush2.bf16.msra.mxu0 0
    %354 = vmatprep.subr.bf16.mxu0 0
    %355 = vmatpush2.bf16.msra.mxu0 0
    %356 = vmatprep.subr.bf16.mxu0 0
    %357 = vmatpush2.bf16.msra.mxu0 0
    %358 = vmatprep.subr.bf16.mxu0 0
    %359 = vmatpush2.bf16.msra.mxu0 0
    %360 = vmatprep.subr.bf16.mxu0 0
    %361 = vmatpush2.bf16.msra.mxu0 0
    %362 = vmatprep.subr.bf16.mxu0 0
    %363 = vmatpush2.bf16.msra.mxu0 0
    %364 = vmatprep.subr.bf16.mxu0 0
    %365 = vmatpush2.bf16.msra.mxu0 0
    %366 = vmatprep.subr.bf16.mxu0 0
    %367 = vmatpush2.bf16.msra.mxu0 0
    %368 = vmatprep.mubr.bf16.mxu0 0
    %369 = vmatmul.mubr.bf16.gmra.mxu0 %v264
    %v370 = vpop.f32.mrf.mxu0
    %v371 = vadd.f32 %v286, %v370
    %v372 = vpop.f32.mrf.mxu0
    %v373 = vpop.f32.mrf.mxu0
    %v374 = vpop.f32.mrf.mxu0
    %375 = vdwg.mxu0
    %v376 = vlaneseq
    %v377 = vand.u32 %v376, 127
    %vm378 = vcmp.lt.s32.totalorder %v377, 10
    %v379 = vsel %vm378, %v371, -1e+30
    %380 = vmax.xlane.f32.xlu0 %v379
    %v381 = vpop.xlane.xlu0 %380
    %v382 = vsub.f32 %v379, %v381
    %v383 = vmul.f32 %v382, 1.442695
    %v384 = vpow.pop %v383
    %385 = vadd.xlane.f32.xlu0 %v384
    %v386 = vpop.xlane.xlu0 %385
    %v387 = vlog2.pop %v386
    %v388 = vmul.f32 %v387, 0.6931472
    %v389 = vsub.f32 %v382, %v388
    %390 = vst [vmem:[#allocation2] sm:$0xff] %v389
    // Predicated region
    $region30: #{mlp_forward.1} parent=1 // pred_check
      _
    $region31: #{mlp_forward.1} parent=1 // pred_check_branch
      %392 = sbr.rel (0) target = $region33
    $region32: #{mlp_forward.1} parent=1 // pred_region
      %s394 = ssub.s32 128, 128
      %395 = vsyncadd [#allocation3], %s394
      %s397 = sshll.u32 [#allocation2], 4
      %s398 = int_to_ptr.vmem [resolvable:$true] %s397
      %400 = dma.vmem_to_hbm [thread:$0]  %s398, 128, %s7, [#allocation3]
    $region33: #{mlp_forward.1} parent=1 // pred_fallthru
      _
    // Predicated region
    $region34: #{mlp_forward.1} parent=1 // pred_check
      _
    $region35: #{mlp_forward.1} parent=1 // pred_check_branch
      %402 = sbr.rel (0) target = $region37
    $region36: #{mlp_forward.1} parent=1 // pred_region
      %403 = dma.done [#allocation3], 128
    $region37: #{mlp_forward.1} parent=1 // pred_fallthru
      _
    %404 = vsyncpa [#allocation3], 1

</llo_original>
